<compile_context>
chip_gen: v6e
topology: v6e:2x2x1
jax: 0.10.0
libtpu: 0.0.40
codegen_flags: <defaults>
</compile_context>

<pallas_src>
import functools

import jax
import jax.numpy as jnp
from jax.experimental import pallas as pl
from jax.experimental.pallas import tpu as pltpu


def _soft_ce_kernel(pred_ref, label_ref, out_ref,
                    m_ref, l_ref, lsum_ref, xl_ref,
                    *, n_rows, n_cols, tm, tc, mask_rows, mask_cols):
    i = pl.program_id(0)          # row-tile index   ("parallel")
    j = pl.program_id(1)          # class-tile index ("arbitrary" reduction)

    @pl.when(j == 0)
    def _():
        m_ref[...] = jnp.full_like(m_ref, -jnp.inf)
        l_ref[...] = jnp.zeros_like(l_ref)
        lsum_ref[...] = jnp.zeros_like(lsum_ref)
        xl_ref[...] = jnp.zeros_like(xl_ref)

    x = pred_ref[...].astype(jnp.float32)      # (tm, tc)
    lbl = label_ref[...].astype(jnp.float32)   # (tm, tc)

    # Mask tail tiles (only emitted when statically needed).
    if mask_rows or mask_cols:
        valid = None
        if mask_rows:
            row_ids = i * tm + jax.lax.broadcasted_iota(jnp.int32, (tm, tc), 0)
            valid = row_ids < n_rows
        if mask_cols:
            col_ids = j * tc + jax.lax.broadcasted_iota(jnp.int32, (tm, tc), 1)
            cvalid = col_ids < n_cols
            valid = cvalid if valid is None else (valid & cvalid)
        x = jnp.where(valid, x, jnp.float32(-1e30))
        lbl = jnp.where(valid, lbl, jnp.float32(0.0))

    # Online logsumexp over the class axis (tiled in tc-wide chunks).
    tile_max = jnp.max(x, axis=-1, keepdims=True)            # (tm, 1)
    m_new = jnp.maximum(m_ref[...], tile_max)
    l_ref[...] = (l_ref[...] * jnp.exp(m_ref[...] - m_new)
                  + jnp.sum(jnp.exp(x - m_new), axis=-1, keepdims=True))
    m_ref[...] = m_new

    # Running per-row sums needed by the algebraic rewrite.
    lsum_ref[...] += jnp.sum(lbl, axis=-1, keepdims=True)         # sum(label)
    xl_ref[...] += jnp.sum(x * lbl, axis=-1, keepdims=True)       # sum(x*label)

    @pl.when(j == pl.num_programs(1) - 1)
    def _():
        lse = m_ref[...] + jnp.log(l_ref[...])                    # (tm, 1)
        per_row = lse * lsum_ref[...] - xl_ref[...]               # (tm, 1)
        out_ref[0, 0] = jnp.sum(per_row)                          # per-tile partial


def _round_up(x, m):
    return ((x + m - 1) // m) * m


def _vmem_capacity_bytes():
    try:
        return int(pltpu.get_tpu_info().vmem_capacity_bytes)
    except Exception:
        return 64 * 1024 * 1024   # conservative fallback (v7x per-TC size)


def _choose_tiles(n, c, in_itemsize):
    """Generation-aware tile sizes + a VMEM limit for the compiler."""
    vmem_cap = _vmem_capacity_bytes()
    budget = vmem_cap // 2                      # headroom for compiler scratch

    # Class tile: take C whole when modest, otherwise a 128-multiple chunk.
    tc = c if c <= 2048 else 2048

    # Per-row VMEM bytes: 2 inputs x 2 pipeline buffers (HBM-side dtype)
    # plus ~4 f32 (tm, tc) intermediates (x, lbl, exp, x*lbl).
    bytes_per_row = 2 * 2 * tc * in_itemsize + 4 * tc * 4
    tm = budget // max(bytes_per_row, 1)
    tm = max(16, min(int(tm), 1024))
    tm = (tm // 16) * 16                        # bf16 sublane-packing friendly
    tm = min(tm, _round_up(n, 8))               # don't exceed the (padded) batch
    tm = max(8, (tm // 8) * 8)

    # VMEM limit sized to the chosen tiles (+margin), never above capacity.
    needed = 2 * 2 * tm * tc * in_itemsize + 6 * tm * tc * 4 + (2 << 20)
    vmem_limit = min(int(vmem_cap * 0.9), max(needed, 32 * 1024 * 1024))
    return tm, tc, vmem_limit


def soft_ce_loss(pred, label, loss_weight=1.0):
    """Pallas TPU implementation of SoftCELoss.forward -> scalar f32 loss."""
    assert pred.shape == label.shape and pred.ndim == 2
    n, c = pred.shape
    in_itemsize = max(jnp.dtype(pred.dtype).itemsize,
                      jnp.dtype(label.dtype).itemsize)

    tm, tc, vmem_limit = _choose_tiles(n, c, in_itemsize)
    grid = (pl.cdiv(n, tm), pl.cdiv(c, tc))
    mask_rows = (n % tm) != 0
    mask_cols = (c % tc) != 0

    kernel = functools.partial(
        _soft_ce_kernel, n_rows=n, n_cols=c, tm=tm, tc=tc,
        mask_rows=mask_rows, mask_cols=mask_cols)

    partials = pl.pallas_call(
        kernel,
        out_shape=jax.ShapeDtypeStruct((grid[0], 1), jnp.float32),
        grid_spec=pltpu.PrefetchScalarGridSpec(
            num_scalar_prefetch=0,
            grid=grid,
            in_specs=[
                pl.BlockSpec((tm, tc), lambda i, j: (i, j)),
                pl.BlockSpec((tm, tc), lambda i, j: (i, j)),
            ],
            out_specs=pl.BlockSpec((1, 1), lambda i, j: (i, 0),
                                   memory_space=pltpu.SMEM),
            scratch_shapes=[
                pltpu.VMEM((tm, 1), jnp.float32),   # running max  m
                pltpu.VMEM((tm, 1), jnp.float32),   # running sum-exp  l
                pltpu.VMEM((tm, 1), jnp.float32),   # running sum(label)
                pltpu.VMEM((tm, 1), jnp.float32),   # running sum(x*label)
            ]),
        compiler_params=pltpu.CompilerParams(
            dimension_semantics=("parallel", "arbitrary"),
            vmem_limit_bytes=vmem_limit),
    )(pred, label)

    scale = jnp.float32(float(loss_weight) / float(n))
    return jnp.sum(partials) * scale


class SoftCELoss:
    """JAX/Pallas port of mmcls SoftCELoss (no learnable params)."""

    def __init__(self, loss_weight=1.0):
        self.loss_weight = loss_weight

    def __call__(self, cls_score, label):
        return soft_ce_loss(cls_score, label, loss_weight=self.loss_weight)


def _reference(pred, label, loss_weight=1.0):
    logp = jax.nn.log_softmax(pred.astype(jnp.float32), axis=1)
    return loss_weight * jnp.sum(-logp * label.astype(jnp.float32)) / pred.shape[0]


if __name__ == "__main__":
    key = jax.random.PRNGKey(0)
    k1, k2, k3, k4 = jax.random.split(key, 4)

    # Primary small case: batch=8, num_classes=32.
    N, C = 8, 32
    cls_score = jax.random.normal(k1, (N, C), dtype=jnp.float32)
    label = jax.nn.softmax(jax.random.normal(k2, (N, C), dtype=jnp.float32), axis=1)

    module = SoftCELoss(loss_weight=1.0)
    loss = module(cls_score, label)
    jax.block_until_ready(loss)
    ref = _reference(cls_score, label, 1.0)
    assert jnp.allclose(loss, ref, rtol=1e-5, atol=1e-5), (loss, ref)

    # Awkward shapes (N not a multiple of 8) exercise the masked tail-tile path.
    N2, C2 = 10, 100
    x2 = jax.random.normal(k3, (N2, C2), dtype=jnp.float32)
    l2 = jax.nn.softmax(jax.random.normal(k4, (N2, C2), dtype=jnp.float32), axis=1)
    loss2 = soft_ce_loss(x2, l2, loss_weight=0.5)
    jax.block_until_ready(loss2)
    ref2 = _reference(x2, l2, 0.5)
    assert jnp.allclose(loss2, ref2, rtol=1e-5, atol=1e-5), (loss2, ref2)

    print("KERNEL_OK")
</pallas_src>

<mosaic_0001>
module attributes {stable_mosaic.version = 11 : i64} {
  func.func @_soft_ce_kernel(%arg0: i32, %arg1: i32, %arg2: memref<8x32xf32, #tpu.memory_space<vmem>>, %arg3: memref<8x32xf32, #tpu.memory_space<vmem>>, %arg4: memref<1x1xf32, #tpu.memory_space<smem>>, %arg5: memref<8x1xf32, #tpu.memory_space<vmem>>, %arg6: memref<8x1xf32, #tpu.memory_space<vmem>>, %arg7: memref<8x1xf32, #tpu.memory_space<vmem>>, %arg8: memref<8x1xf32, #tpu.memory_space<vmem>>) attributes {dimension_semantics = [#tpu.dimension_semantics<parallel>, #tpu.dimension_semantics<arbitrary>], iteration_bounds = array<i64: 1, 1>, scalar_prefetch = 0 : i64, scratch_operands = 4 : i64, tpu.core_type = #tpu.core_type<tc>, window_params = [{transform_indices = @transform_0, window_bounds = array<i64: 8, 32>}, {transform_indices = @transform_1, window_bounds = array<i64: 8, 32>}, {transform_indices = @transform_2, window_bounds = array<i64: 1, 1>}]} {
    %c0_i32 = arith.constant 0 : i32
    %0 = arith.cmpi eq, %arg1, %c0_i32 : i32
    %1 = arith.extui %0 : i1 to i32
    %c0_i32_0 = arith.constant 0 : i32
    %2 = arith.cmpi ne, %1, %c0_i32_0 : i32
    scf.if %2 {
      %cst_27 = arith.constant 0xFF800000 : f32
      %36 = vector.broadcast %cst_27 : f32 to vector<8x1xf32>
      %c0_28 = arith.constant 0 : index
      %c0_29 = arith.constant 0 : index
      %37 = vector.load %arg5[%c0_28, %c0_29] : memref<8x1xf32, #tpu.memory_space<vmem>>, vector<8x1xf32>
      tpu.vector_store %arg5[%c0_28, %c0_29], %36 {strides = array<i32>} : memref<8x1xf32, #tpu.memory_space<vmem>>, vector<8x1xf32>,
      %cst_30 = arith.constant 0.000000e+00 : f32
      %38 = vector.broadcast %cst_30 : f32 to vector<8x1xf32>
      %c0_31 = arith.constant 0 : index
      %c0_32 = arith.constant 0 : index
      %39 = vector.load %arg6[%c0_31, %c0_32] : memref<8x1xf32, #tpu.memory_space<vmem>>, vector<8x1xf32>
      tpu.vector_store %arg6[%c0_31, %c0_32], %38 {strides = array<i32>} : memref<8x1xf32, #tpu.memory_space<vmem>>, vector<8x1xf32>,
      %cst_33 = arith.constant 0.000000e+00 : f32
      %40 = vector.broadcast %cst_33 : f32 to vector<8x1xf32>
      %c0_34 = arith.constant 0 : index
      %c0_35 = arith.constant 0 : index
      %41 = vector.load %arg7[%c0_34, %c0_35] : memref<8x1xf32, #tpu.memory_space<vmem>>, vector<8x1xf32>
      tpu.vector_store %arg7[%c0_34, %c0_35], %40 {strides = array<i32>} : memref<8x1xf32, #tpu.memory_space<vmem>>, vector<8x1xf32>,
      %cst_36 = arith.constant 0.000000e+00 : f32
      %42 = vector.broadcast %cst_36 : f32 to vector<8x1xf32>
      %c0_37 = arith.constant 0 : index
      %c0_38 = arith.constant 0 : index
      %43 = vector.load %arg8[%c0_37, %c0_38] : memref<8x1xf32, #tpu.memory_space<vmem>>, vector<8x1xf32>
      tpu.vector_store %arg8[%c0_37, %c0_38], %42 {strides = array<i32>} : memref<8x1xf32, #tpu.memory_space<vmem>>, vector<8x1xf32>,
    } else {
    }
    %c0 = arith.constant 0 : index
    %c0_1 = arith.constant 0 : index
    %3 = vector.load %arg2[%c0, %c0_1] : memref<8x32xf32, #tpu.memory_space<vmem>>, vector<8x32xf32>
    %c0_2 = arith.constant 0 : index
    %c0_3 = arith.constant 0 : index
    %4 = vector.load %arg3[%c0_2, %c0_3] : memref<8x32xf32, #tpu.memory_space<vmem>>, vector<8x32xf32>
    %cst = arith.constant dense<0xFF800000> : vector<8xf32>
    %5 = vector.multi_reduction <maximumf>, %3, %cst [1] : vector<8x32xf32> to vector<8xf32>
    %6 = vector.shape_cast %5 : vector<8xf32> to vector<8x1xf32>
    %c0_4 = arith.constant 0 : index
    %c0_5 = arith.constant 0 : index
    %7 = vector.load %arg5[%c0_4, %c0_5] : memref<8x1xf32, #tpu.memory_space<vmem>>, vector<8x1xf32>
    %8 = arith.maximumf %7, %6 : vector<8x1xf32>
    %c0_6 = arith.constant 0 : index
    %c0_7 = arith.constant 0 : index
    %9 = vector.load %arg6[%c0_6, %c0_7] : memref<8x1xf32, #tpu.memory_space<vmem>>, vector<8x1xf32>
    %c0_8 = arith.constant 0 : index
    %c0_9 = arith.constant 0 : index
    %10 = vector.load %arg5[%c0_8, %c0_9] : memref<8x1xf32, #tpu.memory_space<vmem>>, vector<8x1xf32>
    %11 = arith.subf %10, %8 : vector<8x1xf32>
    %12 = math.exp %11 : vector<8x1xf32>
    %13 = arith.mulf %9, %12 : vector<8x1xf32>
    %14 = vector.broadcast %8 : vector<8x1xf32> to vector<8x32xf32>
    %15 = arith.subf %3, %14 : vector<8x32xf32>
    %16 = math.exp %15 : vector<8x32xf32>
    %cst_10 = arith.constant dense<0.000000e+00> : vector<8xf32>
    %17 = vector.multi_reduction <add>, %16, %cst_10 [1] : vector<8x32xf32> to vector<8xf32>
    %18 = vector.shape_cast %17 : vector<8xf32> to vector<8x1xf32>
    %19 = arith.addf %13, %18 : vector<8x1xf32>
    %c0_11 = arith.constant 0 : index
    %c0_12 = arith.constant 0 : index
    %20 = vector.load %arg6[%c0_11, %c0_12] : memref<8x1xf32, #tpu.memory_space<vmem>>, vector<8x1xf32>
    tpu.vector_store %arg6[%c0_11, %c0_12], %19 {strides = array<i32>} : memref<8x1xf32, #tpu.memory_space<vmem>>, vector<8x1xf32>,
    %c0_13 = arith.constant 0 : index
    %c0_14 = arith.constant 0 : index
    %21 = vector.load %arg5[%c0_13, %c0_14] : memref<8x1xf32, #tpu.memory_space<vmem>>, vector<8x1xf32>
    tpu.vector_store %arg5[%c0_13, %c0_14], %8 {strides = array<i32>} : memref<8x1xf32, #tpu.memory_space<vmem>>, vector<8x1xf32>,
    %c0_15 = arith.constant 0 : index
    %c0_16 = arith.constant 0 : index
    %22 = vector.load %arg7[%c0_15, %c0_16] : memref<8x1xf32, #tpu.memory_space<vmem>>, vector<8x1xf32>
    %cst_17 = arith.constant dense<0.000000e+00> : vector<8xf32>
    %23 = vector.multi_reduction <add>, %4, %cst_17 [1] : vector<8x32xf32> to vector<8xf32>
    %24 = vector.shape_cast %23 : vector<8xf32> to vector<8x1xf32>
    %25 = arith.addf %22, %24 : vector<8x1xf32>
    %c0_18 = arith.constant 0 : index
    %c0_19 = arith.constant 0 : index
    %26 = vector.load %arg7[%c0_18, %c0_19] : memref<8x1xf32, #tpu.memory_space<vmem>>, vector<8x1xf32>
    tpu.vector_store %arg7[%c0_18, %c0_19], %25 {strides = array<i32>} : memref<8x1xf32, #tpu.memory_space<vmem>>, vector<8x1xf32>,
    %c0_20 = arith.constant 0 : index
    %c0_21 = arith.constant 0 : index
    %27 = vector.load %arg8[%c0_20, %c0_21] : memref<8x1xf32, #tpu.memory_space<vmem>>, vector<8x1xf32>
    %28 = arith.mulf %3, %4 : vector<8x32xf32>
    %cst_22 = arith.constant dense<0.000000e+00> : vector<8xf32>
    %29 = vector.multi_reduction <add>, %28, %cst_22 [1] : vector<8x32xf32> to vector<8xf32>
    %30 = vector.shape_cast %29 : vector<8xf32> to vector<8x1xf32>
    %31 = arith.addf %27, %30 : vector<8x1xf32>
    %c0_23 = arith.constant 0 : index
    %c0_24 = arith.constant 0 : index
    %32 = vector.load %arg8[%c0_23, %c0_24] : memref<8x1xf32, #tpu.memory_space<vmem>>, vector<8x1xf32>
    tpu.vector_store %arg8[%c0_23, %c0_24], %31 {strides = array<i32>} : memref<8x1xf32, #tpu.memory_space<vmem>>, vector<8x1xf32>,
    %c0_i32_25 = arith.constant 0 : i32
    %33 = arith.cmpi eq, %arg1, %c0_i32_25 : i32
    %34 = arith.extui %33 : i1 to i32
    %c0_i32_26 = arith.constant 0 : i32
    %35 = arith.cmpi ne, %34, %c0_i32_26 : i32
    scf.if %35 {
      %c0_27 = arith.constant 0 : index
      %c0_28 = arith.constant 0 : index
      %36 = vector.load %arg5[%c0_27, %c0_28] : memref<8x1xf32, #tpu.memory_space<vmem>>, vector<8x1xf32>
      %c0_29 = arith.constant 0 : index
      %c0_30 = arith.constant 0 : index
      %37 = vector.load %arg6[%c0_29, %c0_30] : memref<8x1xf32, #tpu.memory_space<vmem>>, vector<8x1xf32>
      %38 = math.log %37 : vector<8x1xf32>
      %39 = arith.addf %36, %38 : vector<8x1xf32>
      %c0_31 = arith.constant 0 : index
      %c0_32 = arith.constant 0 : index
      %40 = vector.load %arg7[%c0_31, %c0_32] : memref<8x1xf32, #tpu.memory_space<vmem>>, vector<8x1xf32>
      %41 = arith.mulf %39, %40 : vector<8x1xf32>
      %c0_33 = arith.constant 0 : index
      %c0_34 = arith.constant 0 : index
      %42 = vector.load %arg8[%c0_33, %c0_34] : memref<8x1xf32, #tpu.memory_space<vmem>>, vector<8x1xf32>
      %43 = arith.subf %41, %42 : vector<8x1xf32>
      %44 = vector.shape_cast %43 : vector<8x1xf32> to vector<1x8x1xf32>
      %cst_35 = arith.constant dense<0.000000e+00> : vector<1xf32>
      %45 = vector.multi_reduction <add>, %44, %cst_35 [1, 2] : vector<1x8x1xf32> to vector<1xf32>
      %46 = vector.shape_cast %45 : vector<1xf32> to vector<1x1x1xf32>
      %47 = vector.extract %46[0, 0, 0] : f32 from vector<1x1x1xf32>
      %c0_36 = arith.constant 0 : index
      %c0_37 = arith.constant 0 : index
      %48 = memref.load %arg4[%c0_36, %c0_37] : memref<1x1xf32, #tpu.memory_space<smem>>
      memref.store %47, %arg4[%c0_36, %c0_37] : memref<1x1xf32, #tpu.memory_space<smem>>
    } else {
    }
    return
  }
  func.func @transform_0(%arg0: i32, %arg1: i32) -> (i32, i32) {
    %c0_i32 = arith.constant 0 : i32
    return %arg0, %arg1 : i32, i32
  }
  func.func @transform_1(%arg0: i32, %arg1: i32) -> (i32, i32) {
    %c0_i32 = arith.constant 0 : i32
    return %arg0, %arg1 : i32, i32
  }
  func.func @transform_2(%arg0: i32, %arg1: i32) -> (i32, i32) {
    %c0_i32 = arith.constant 0 : i32
    %c0_i32_0 = arith.constant 0 : i32
    return %arg0, %c0_i32 : i32, i32
  }
}

</mosaic_0001>

<llo_original>
// kernel: tpu_custom_call.1
$region0: #{tpu_custom_call.1}
  #allocation0 [shape = 'u32[]', space=smem, size = 0x4, offset = 0x4, fixed_abs, tag = 'smem constant byte address 0x4 - core index']
  #allocation1 [shape = 'u32[144,128]{1,0:T(1,128)}', space=vmem, size = 0x12000, scoped, tag = 'internal scratch']
  #allocation2 [shape = 'f32[8,1]{1,0:T(8,128)}', space=vmem, size = 0x1000, scoped, tag = 'scratch operand']
  #allocation3 [shape = 'f32[8,1]{1,0:T(8,128)}', space=vmem, size = 0x1000, scoped, tag = 'scratch operand']
  #allocation4 [shape = 'f32[8,1]{1,0:T(8,128)}', space=vmem, size = 0x1000, scoped, tag = 'scratch operand']
  #allocation5 [shape = 'f32[8,1]{1,0:T(8,128)}', space=vmem, size = 0x1000, scoped, tag = 'scratch operand']
  %s0 = inlined_call_operand.hbm [shape: f32[8,32], index: 0, kind: input, shape index: {}]
  %s1 = inlined_call_operand.hbm [shape: f32[8,32], index: 1, kind: input, shape index: {}]
  %s2 = inlined_call_operand.hbm [shape: f32[1,1], index: 2, kind: output, shape index: {}]
  %s3 = sld [smem:[#allocation0]]
  $region34: #{tpu_custom_call.1} parent=0
    _
  %s5 = ssub.s32 1, %s3
  %s6 = scalar_select 0, %s5, %s3
  $region1: #{tpu_custom_call.1} parent=0
    #allocation6 [shape = 'u8[4096]{0}', space=vmem, size = 0x1000, scoped, tag = 'input window, operand 0, single buffered']
    #allocation7 [shape = 's32[1]{0}', space=sflag, size = 0x4, scoped, tag = 'scoped memory for tpu_custom_call.1']
    #allocation8 [shape = 's32[1]{0}', space=sflag, size = 0x4, scoped, tag = 'scoped memory for tpu_custom_call.1']
    #allocation9 [shape = 'u8[4096]{0}', space=vmem, size = 0x1000, scoped, tag = 'input window, operand 1, single buffered']
    #allocation10 [shape = 's32[1]{0}', space=sflag, size = 0x4, scoped, tag = 'scoped memory for tpu_custom_call.1']
    #allocation11 [shape = 'u8[512]{0}', space=smem, size = 0x200, scoped, tag = 'output window, operand 0, single buffered']
    %7 = vsyncpa [#allocation7], 0
    %8 = vsyncpa [#allocation10], 0
    %9 = vsyncpa [#allocation8], 0
    // Predicated region
    $region2: #{tpu_custom_call.1} parent=1 // pred_check
      _
    $region3: #{tpu_custom_call.1} parent=1 // pred_check_branch
      %11 = sbr.rel (0) target = $region5
    $region4: #{tpu_custom_call.1} parent=1 // pred_region
      %s13 = ssub.s32 128, 128
      %14 = vsyncadd [#allocation7], %s13
      %s16 = sshll.u32 [#allocation6], 4
      %s17 = int_to_ptr.vmem [resolvable:$true] %s16
      %19 = dma.hbm_to_vmem [thread:$0]  %s0, 128, %s17, [#allocation7]
    $region5: #{tpu_custom_call.1} parent=1 // pred_fallthru
      _
    // Predicated region
    $region6: #{tpu_custom_call.1} parent=1 // pred_check
      _
    $region7: #{tpu_custom_call.1} parent=1 // pred_check_branch
      %21 = sbr.rel (0) target = $region9
    $region8: #{tpu_custom_call.1} parent=1 // pred_region
      %s23 = ssub.s32 128, 128
      %24 = vsyncadd [#allocation10], %s23
      %s26 = sshll.u32 [#allocation9], 4
      %s27 = int_to_ptr.vmem [resolvable:$true] %s26
      %29 = dma.hbm_to_vmem [thread:$0]  %s1, 128, %s27, [#allocation10]
    $region9: #{tpu_custom_call.1} parent=1 // pred_fallthru
      _
    // Predicated region
    $region10: #{tpu_custom_call.1} parent=1 // pred_check
      _
    $region11: #{tpu_custom_call.1} parent=1 // pred_check_branch
      %31 = sbr.rel (0) target = $region13
    $region12: #{tpu_custom_call.1} parent=1 // pred_region
      %32 = dma.done [#allocation7], 128
    $region13: #{tpu_custom_call.1} parent=1 // pred_fallthru
      _
    // Predicated region
    $region14: #{tpu_custom_call.1} parent=1 // pred_check
      _
    $region15: #{tpu_custom_call.1} parent=1 // pred_check_branch
      %34 = sbr.rel (0) target = $region17
    $region16: #{tpu_custom_call.1} parent=1 // pred_region
      %35 = dma.done [#allocation10], 128
    $region17: #{tpu_custom_call.1} parent=1 // pred_fallthru
      _
    %p36 = scmp.eq.s32.totalorder 0, 0
    // Predicated region
    $region18: #{tpu_custom_call.1} parent=1 // pred_check
      %p37 = pneg %p36
    $region19: #{tpu_custom_call.1} parent=1 // pred_check_branch
      %39 = sbr.rel (%p37) target = $region21
    $region20: #{tpu_custom_call.1} parent=1 // pred_region
      %vm40 = vcmask 7168
      %41 = vst.msk [vmem:[#allocation2] sm:$0xff] %vm40, -inf
      %42 = vst.msk [vmem:[#allocation3] sm:$0xff] %vm40, 0.0
      %43 = vst.msk [vmem:[#allocation4] sm:$0xff] %vm40, 0.0
      %44 = vst.msk [vmem:[#allocation5] sm:$0xff] %vm40, 0.0
    $region21: #{tpu_custom_call.1} parent=1 // pred_fallthru
      _
    %v45 = vld [vmem:[#allocation6] sm:$0xff]
    %v46 = vld [vmem:[#allocation9] sm:$0xff]
    %vm47 = vcmask 261120
    %v48 = vsel %vm47, %v45, -inf
    %49 = vmax.xlane.f32.xlu0 %v48
    %v50 = vpop.xlane.xlu0 %49
    %v51 = vld [vmem:[#allocation2] sm:$0xff]
    %v52 = vmax.f32 %v51, %v50
    %v53 = vld [vmem:[#allocation3] sm:$0xff]
    %v54 = vsub.f32 %v51, %v52
    %v55 = vmul.f32 %v54, 1.442695
    %v56 = vpow.pop %v55
    %v57 = vmul.f32 %v53, %v56
    %59 = vset.pattern.permute.xlu0 0
    %60 = vperm.xlu0 %59, %v52
    %v61 = vpop.permute.xlu0 %60
    %v63 = vsub.f32 %v45, %v61
    %v64 = vmul.f32 %v63, 1.442695
    %v65 = vpow.pop %v64
    %v66 = vsel %vm47, %v65, 0.0
    %67 = vadd.xlane.f32.xlu0 %v66
    %v68 = vpop.xlane.xlu0 %67
    %v69 = vadd.f32 %v57, %v68
    %vm70 = vcmask 7168
    %71 = vst.msk [vmem:[#allocation3] sm:$0xff] %vm70, %v69
    %72 = vst.msk [vmem:[#allocation2] sm:$0xff] %vm70, %v52
    %v73 = vld [vmem:[#allocation4] sm:$0xff]
    %v74 = vsel %vm47, %v46, 0.0
    %75 = vadd.xlane.f32.xlu0 %v74
    %v76 = vpop.xlane.xlu0 %75
    %v77 = vadd.f32 %v73, %v76
    %78 = vst.msk [vmem:[#allocation4] sm:$0xff] %vm70, %v77
    %v79 = vld [vmem:[#allocation5] sm:$0xff]
    %v80 = vmul.f32 %v45, %v46
    %v81 = vsel %vm47, %v80, 0.0
    %82 = vadd.xlane.f32.xlu0 %v81
    %v83 = vpop.xlane.xlu0 %82
    %v84 = vadd.f32 %v79, %v83
    %85 = vst.msk [vmem:[#allocation5] sm:$0xff] %vm70, %v84
    // Predicated region
    $region22: #{tpu_custom_call.1} parent=1 // pred_check
      %p86 = pneg %p36
    $region23: #{tpu_custom_call.1} parent=1 // pred_check_branch
      %88 = sbr.rel (%p86) target = $region25
    $region24: #{tpu_custom_call.1} parent=1 // pred_region
      %v89 = vld [vmem:[#allocation2] sm:$0xff]
      %v90 = vld [vmem:[#allocation3] sm:$0xff]
      %v91 = vlog2.pop %v90
      %v92 = vmul.f32 %v91, 0.6931472
      %v93 = vadd.f32 %v89, %v92
      %v94 = vld [vmem:[#allocation4] sm:$0xff]
      %v95 = vmul.f32 %v93, %v94
      %v96 = vld [vmem:[#allocation5] sm:$0xff]
      %v97 = vsub.f32 %v95, %v96
      %v98 = vsel %vm70, %v97, 0.0
      %99 = vadd.xlane.f32.xlu0 %v98
      %v100 = vpop.xlane.xlu0 %99
      %v101 = vrot.slane %v100, 4
      %v102 = vadd.f32 %v100, %v101
      %v103 = vrot.slane %v102, 2
      %v104 = vadd.f32 %v102, %v103
      %v105 = vrot.slane %v104, 1
      %v106 = vadd.f32 %v104, %v105
      %s107 = vtos %v106
      %s108 = scalar_lea.smem [#allocation11], 0
      %109 = sst [smem:[%s108]] %s107
    $region25: #{tpu_custom_call.1} parent=1 // pred_fallthru
      _
    // Predicated region
    $region26: #{tpu_custom_call.1} parent=1 // pred_check
      _
    $region27: #{tpu_custom_call.1} parent=1 // pred_check_branch
      %111 = sbr.rel (0) target = $region29
    $region28: #{tpu_custom_call.1} parent=1 // pred_region
      %s113 = ssub.s32 16, 16
      %114 = vsyncadd [#allocation8], %s113
      %117 = dma.smem_to_hbm [#allocation11], 16, %s2, [#allocation8]
    $region29: #{tpu_custom_call.1} parent=1 // pred_fallthru
      _
    // Predicated region
    $region30: #{tpu_custom_call.1} parent=1 // pred_check
      _
    $region31: #{tpu_custom_call.1} parent=1 // pred_check_branch
      %119 = sbr.rel (0) target = $region33
    $region32: #{tpu_custom_call.1} parent=1 // pred_region
      %120 = dma.done [#allocation8], 16
    $region33: #{tpu_custom_call.1} parent=1 // pred_fallthru
      _
    %121 = sfence
    %122 = vsyncpa [#allocation7], 1
    %123 = vsyncpa [#allocation10], 1
    %124 = vsyncpa [#allocation8], 1

</llo_original>
